<compile_context>
chip_gen: v7x
topology: tpu7x:2x2x1
jax: 0.10.0
libtpu: 0.0.40
codegen_flags: <defaults>
</compile_context>

<pallas_src>
import functools

import jax
import jax.numpy as jnp
from jax import lax
from jax.experimental import pallas as pl
from jax.experimental.pallas import tpu as pltpu


# ----------------------------------------------------------------------------
# small helpers
# ----------------------------------------------------------------------------
def _cdiv(a, b):
    return (a + b - 1) // b


def _ceil_to(a, b):
    return _cdiv(a, b) * b


def _pad_axis(a, axis, target):
    if a.shape[axis] == target:
        return a
    widths = [(0, 0)] * a.ndim
    widths[axis] = (0, target - a.shape[axis])
    return jnp.pad(a, widths)


def _vmem_capacity_bytes():
    """Per-generation VMEM capacity (v5e/v6e: 128 MiB, v7x: 64 MiB)."""
    try:
        return max(int(pltpu.get_tpu_info().vmem_capacity_bytes), 32 << 20)
    except Exception:
        return 64 << 20  # conservative fallback (v7x per-core VMEM)


# ----------------------------------------------------------------------------
# Fused TNet linear chain (the primary kernel)
# ----------------------------------------------------------------------------
def _tnet_chain_kernel(x_ref, eps_ref, w_mv_ref, b_mv_ref, w_rec_ref, b_rec_ref,
                       w_p1_ref, b_p1_ref, w_p2_ref, b_p2_ref,
                       qz_ref, mean_ref, var_ref, rec_ref, pred_ref,
                       *, z_dim, compute_dtype, mean_inference):
    """One batch element of TNet's deterministic linear path, fully in VMEM."""

    def feed(a):  # MXU operand dtype (bf16 by default); accumulation is f32.
        if compute_dtype is not None and a.dtype != compute_dtype:
            return a.astype(compute_dtype)
        return a

    x = x_ref[0]                                    # [T, in_dim]
    xc = feed(x)

    # loc_net / var_net fused into one GEMM against the concatenated weight.
    mv = jnp.dot(xc, feed(w_mv_ref[...]),
                 preferred_element_type=jnp.float32) + b_mv_ref[...]
    mean = mv[:, :z_dim]
    var = jax.nn.softplus(mv[:, z_dim:])            # nn.Softplus on the var branch
    qz = mean + var * eps_ref[0]                    # Normal(mean, var).rsample()

    mean_ref[0] = mean.astype(mean_ref.dtype)
    var_ref[0] = var.astype(var_ref.dtype)
    qz_ref[0] = qz.astype(qz_ref.dtype)

    # RecUnit_t: Linear(z_dim -> in_dim) on the sample.
    rec = jnp.dot(feed(qz), feed(w_rec_ref[...]),
                  preferred_element_type=jnp.float32) + b_rec_ref[...]
    rec_ref[0] = rec.astype(rec_ref.dtype)

    # t_pred_1: Linear over the seq axis; the permute(0,2,1) is folded into the
    # contraction (contract dim 0 of both operands) — no HBM transpose.
    z = mean if mean_inference else qz
    h = lax.dot_general(feed(z), feed(w_p1_ref[...]),
                        dimension_numbers=(((0,), (0,)), ((), ())),
                        preferred_element_type=jnp.float32) + b_p1_ref[...]
    # t_pred_2: Linear(z_dim -> out_dim) on h^T, the second permute folded in.
    pred = lax.dot_general(feed(h), feed(w_p2_ref[...]),
                           dimension_numbers=(((0,), (0,)), ((), ())),
                           preferred_element_type=jnp.float32) + b_p2_ref[...]
    pred_ref[0] = pred.astype(pred_ref.dtype)


def tnet_linear_chain(x_his, eps, params, *, compute_dtype=jnp.bfloat16,
                      mean_inference=True):
    """Runs loc_net, var_net(+Softplus), rsample, RecUnit_t, t_pred_1, t_pred_2
    of TNet as ONE pallas_call. Returns (qz, mean, var, xt_rec, xt_pred)."""
    B, T, Din = x_his.shape
    Zt = params["z_dim"]
    P = params["w_p1"].shape[1]
    Dout = params["w_p2"].shape[1]
    assert eps.shape == (B, T, Zt)
    out_dtype = x_his.dtype

    kernel = functools.partial(
        _tnet_chain_kernel, z_dim=Zt, compute_dtype=compute_dtype,
        mean_inference=mean_inference)

    bmap = lambda b: (b, 0, 0)     # per-batch tiles
    wmap = lambda b: (0, 0)        # weights stay resident across grid steps

    weights = (params["w_mv"], params["b_mv"], params["w_rec"], params["b_rec"],
               params["w_p1"], params["b_p1"], params["w_p2"], params["b_p2"])

    in_specs = [pl.BlockSpec((1, T, Din), bmap),      # x_his
                pl.BlockSpec((1, T, Zt), bmap)]       # eps
    in_specs += [pl.BlockSpec(w.shape, wmap) for w in weights]

    out_specs = [pl.BlockSpec((1, T, Zt), bmap),      # qz
                 pl.BlockSpec((1, T, Zt), bmap),      # mean
                 pl.BlockSpec((1, T, Zt), bmap),      # var
                 pl.BlockSpec((1, T, Din), bmap),     # xt_rec
                 pl.BlockSpec((1, P, Dout), bmap)]    # xt_pred
    out_shape = [jax.ShapeDtypeStruct((B, T, Zt), out_dtype),
                 jax.ShapeDtypeStruct((B, T, Zt), out_dtype),
                 jax.ShapeDtypeStruct((B, T, Zt), out_dtype),
                 jax.ShapeDtypeStruct((B, T, Din), out_dtype),
                 jax.ShapeDtypeStruct((B, P, Dout), out_dtype)]

    param_bytes = sum(int(w.size) * w.dtype.itemsize for w in weights)
    io_bytes = ((x_his.size + eps.size) * x_his.dtype.itemsize
                + (3 * B * T * Zt + B * T * Din + B * P * Dout) * 4)
    cost = pl.CostEstimate(
        flops=2 * B * (T * Din * 2 * Zt + T * Zt * Din + Zt * T * P + P * Zt * Dout),
        transcendentals=2 * B * T * Zt,          # softplus ~ exp + log1p
        bytes_accessed=int(param_bytes + io_bytes),
    )

    outs = pl.pallas_call(
        kernel,
        out_shape=out_shape,
        grid_spec=pltpu.PrefetchScalarGridSpec(
            num_scalar_prefetch=0,
            grid=(B,),
            in_specs=in_specs,
            out_specs=out_specs,
        ),
        compiler_params=pltpu.CompilerParams(
            dimension_semantics=("parallel",)),    # v7x: both TCs split the batch
        cost_estimate=cost,
    )(x_his, eps, *weights)

    qz, mean, var, xt_rec, xt_pred = outs
    return qz, mean, var, xt_rec, xt_pred


# ----------------------------------------------------------------------------
# Generic fused Linear(+activation) kernel — for larger layers
# ----------------------------------------------------------------------------
def _linear_full_k_kernel(*refs, activation, compute_dtype, has_bias):
    if has_bias:
        x_ref, w_ref, b_ref, o_ref = refs
    else:
        x_ref, w_ref, o_ref = refs
        b_ref = None
    x = x_ref[...]
    w = w_ref[...]
    if compute_dtype is not None:
        if x.dtype != compute_dtype:
            x = x.astype(compute_dtype)
        if w.dtype != compute_dtype:
            w = w.astype(compute_dtype)
    acc = jnp.dot(x, w, preferred_element_type=jnp.float32)   # [tm,K] @ [K,tn]
    if has_bias:
        acc = acc + b_ref[...].astype(jnp.float32)
    if activation is not None:
        acc = activation(acc)
    o_ref[...] = acc.astype(o_ref.dtype)


def _linear_tiled_k_kernel(*refs, activation, compute_dtype, has_bias):
    if has_bias:
        x_ref, w_ref, b_ref, o_ref, acc_ref = refs
    else:
        x_ref, w_ref, o_ref, acc_ref = refs
        b_ref = None
    k = pl.program_id(2)

    @pl.when(k == 0)
    def _():
        acc_ref[...] = jnp.zeros_like(acc_ref)

    x = x_ref[...]
    w = w_ref[...]
    if compute_dtype is not None:
        if x.dtype != compute_dtype:
            x = x.astype(compute_dtype)
        if w.dtype != compute_dtype:
            w = w.astype(compute_dtype)
    acc_ref[...] += jnp.dot(x, w, preferred_element_type=jnp.float32)

    @pl.when(k == pl.num_programs(2) - 1)
    def _():
        h = acc_ref[...]
        if has_bias:
            h = h + b_ref[...].astype(jnp.float32)
        if activation is not None:
            h = activation(h)
        o_ref[...] = h.astype(o_ref.dtype)


def linear_forward(x, w_kn, bias=None, activation=None, *,
                   tm=256, tn=256, tk=512, compute_dtype=jnp.bfloat16,
                   max_resident_k=4096):
    """y = activation(x @ w_kn + bias).

    w_kn is the nn.Linear weight PRE-TRANSPOSED to [K, N] (and ideally pre-cast
    to bf16) once at parameter-prep time, so no transpose happens per call.
    Accumulation, bias add and activation are f32.
    """
    orig_shape = x.shape
    K = orig_shape[-1]
    Kw, N = w_kn.shape
    assert Kw == K, f"weight K ({Kw}) != x K ({K})"

    x2 = x.reshape(-1, K)
    M = x2.shape[0]
    out_dtype = x2.dtype
    x_isz = x2.dtype.itemsize
    w_isz = w_kn.dtype.itemsize

    # ---- tile selection -----------------------------------------------------
    tm_eff = min(tm, _ceil_to(M, 8))
    if M > 128 and _cdiv(M, tm_eff) < 2:
        tm_eff = max(128, _ceil_to(_cdiv(M, 2), 8))        # >=2 row blocks
    # lane-dense output: N padded up to a multiple of 128 (unmasked vst)
    tn_eff = 128 if N <= 128 else min(tn, _ceil_to(N, 128))
    if _cdiv(M, tm_eff) == 1 and _cdiv(N, tn_eff) == 1 and tn_eff >= 256:
        tn_eff //= 2                                       # keep both v7x TCs busy
    full_k = K <= max_resident_k
    tk_eff = K if full_k else min(tk, _ceil_to(K, 128))

    Mp = _ceil_to(M, tm_eff)
    Np = _ceil_to(N, tn_eff)
    Kp = K if full_k else _ceil_to(K, tk_eff)

    # ---- zero padding (K-pad contributes 0; M/N pad sliced off) -------------
    x2 = _pad_axis(x2, 0, Mp)
    w = w_kn
    if Np != N:
        w = _pad_axis(w, 1, Np)
    if Kp != K:
        x2 = _pad_axis(x2, 1, Kp)
        w = _pad_axis(w, 0, Kp)

    has_bias = bias is not None
    args = [x2, w]
    if has_bias:
        b2 = bias if Np == N else _pad_axis(bias, 0, Np)
        args.append(b2.reshape(1, Np))

    grid_m, grid_n = Mp // tm_eff, Np // tn_eff

    if full_k:
        grid = (grid_m, grid_n)
        in_specs = [
            pl.BlockSpec((tm_eff, Kp), lambda i, j: (i, 0)),
            pl.BlockSpec((Kp, tn_eff), lambda i, j: (0, j)),
        ]
        if has_bias:
            in_specs.append(pl.BlockSpec((1, tn_eff), lambda i, j: (0, j)))
        out_spec = pl.BlockSpec((tm_eff, tn_eff), lambda i, j: (i, j))
        scratch = []
        sem = ("parallel", "parallel")
        kernel = functools.partial(_linear_full_k_kernel, activation=activation,
                                   compute_dtype=compute_dtype, has_bias=has_bias)
        tk_blk = Kp
    else:
        grid = (grid_m, grid_n, Kp // tk_eff)
        in_specs = [
            pl.BlockSpec((tm_eff, tk_eff), lambda i, j, k: (i, k)),
            pl.BlockSpec((tk_eff, tn_eff), lambda i, j, k: (k, j)),
        ]
        if has_bias:
            in_specs.append(pl.BlockSpec((1, tn_eff), lambda i, j, k: (0, j)))
        out_spec = pl.BlockSpec((tm_eff, tn_eff), lambda i, j, k: (i, j))
        scratch = [pltpu.VMEM((tm_eff, tn_eff), jnp.float32)]
        sem = ("parallel", "parallel", "arbitrary")
        kernel = functools.partial(_linear_tiled_k_kernel, activation=activation,
                                   compute_dtype=compute_dtype, has_bias=has_bias)
        tk_blk = tk_eff

    # ---- VMEM budget: double-buffered blocks + acc, per-generation cap ------
    blk_bytes = (tm_eff * tk_blk * x_isz + tk_blk * tn_eff * w_isz
                 + tm_eff * tn_eff * out_dtype.itemsize)
    if has_bias:
        blk_bytes += tn_eff * 4
    vmem_needed = 2 * blk_bytes + (0 if full_k else tm_eff * tn_eff * 4)
    cap = _vmem_capacity_bytes()                # 128 MiB v5e/v6e, 64 MiB v7x
    vmem_limit = int(min(max(vmem_needed + (16 << 20), 32 << 20), (cap * 3) // 4))

    cost = pl.CostEstimate(
        flops=2 * M * N * K,
        transcendentals=(2 * M * N if activation is not None else 0),
        bytes_accessed=int(M * K * x_isz + K * N * w_isz
                           + (N * 4 if has_bias else 0)
                           + M * N * out_dtype.itemsize),
    )

    out = pl.pallas_call(
        kernel,
        out_shape=jax.ShapeDtypeStruct((Mp, Np), out_dtype),
        grid_spec=pltpu.PrefetchScalarGridSpec(
            num_scalar_prefetch=0,
            grid=grid,
            in_specs=in_specs,
            out_specs=out_spec,
            scratch_shapes=scratch,
        ),
        compiler_params=pltpu.CompilerParams(
            dimension_semantics=sem,
            vmem_limit_bytes=vmem_limit,
        ),
        cost_estimate=cost,
    )(*args)

    if Mp != M or Np != N:
        out = out[:M, :N]
    return out.reshape(*orig_shape[:-1], N)


# ----------------------------------------------------------------------------
# Parameter prep (nn.Linear-style init, then one-time [K,N] transpose + bf16)
# ----------------------------------------------------------------------------
def init_linear_params(key, input_size, output_size, bias=True,
                       dtype=jnp.float32):
    kw, kb = jax.random.split(key)
    bound = 1.0 / (input_size ** 0.5)
    weight = jax.random.uniform(
        kw, (output_size, input_size), dtype=dtype, minval=-bound, maxval=bound)
    b = (jax.random.uniform(kb, (output_size,), dtype=dtype,
                            minval=-bound, maxval=bound) if bias else None)
    return weight, b


def prepare_tnet_params(key, in_dim, inner_t, seq_len, pred_len, out_dim,
                        weight_dtype=jnp.bfloat16):
    """Torch-layout init, then MXU-friendly [K, N] layout, cast once in HBM."""
    ks = jax.random.split(key, 5)
    w_loc, b_loc = init_linear_params(ks[0], in_dim, inner_t)     # VarUnit.loc_net
    w_var, b_var = init_linear_params(ks[1], in_dim, inner_t)     # VarUnit.var_net
    w_rec, b_rec = init_linear_params(ks[2], inner_t, in_dim)     # RecUnit_t
    w_p1, b_p1 = init_linear_params(ks[3], seq_len, pred_len)     # t_pred_1
    w_p2, b_p2 = init_linear_params(ks[4], inner_t, out_dim)      # t_pred_2

    params = {
        "z_dim": inner_t,
        # loc_net + var_net concatenated into one GEMM over the shared input
        "w_mv": jnp.concatenate([w_loc.T, w_var.T], axis=1).astype(weight_dtype),
        "b_mv": jnp.concatenate([b_loc, b_var]).reshape(1, -1),
        "w_rec": w_rec.T.astype(weight_dtype),     # [inner_t, in_dim]
        "b_rec": b_rec.reshape(1, -1),
        "w_p1": w_p1.T.astype(weight_dtype),       # [seq_len, pred_len]
        "b_p1": b_p1.reshape(1, -1),
        "w_p2": w_p2.T.astype(weight_dtype),       # [inner_t, out_dim]
        "b_p2": b_p2.reshape(1, -1),
    }
    raw = dict(w_loc=w_loc, b_loc=b_loc, w_var=w_var, b_var=b_var,
               w_rec=w_rec, b_rec=b_rec, w_p1=w_p1, b_p1=b_p1,
               w_p2=w_p2, b_p2=b_p2)
    return params, raw


def tnet_reference(x, eps, raw, mean_inference=True):
    """Plain-JAX reference with PyTorch nn.Linear semantics (f32, HIGHEST)."""
    hp = lax.Precision.HIGHEST
    mean = jnp.einsum("btk,zk->btz", x, raw["w_loc"], precision=hp) + raw["b_loc"]
    var = jax.nn.softplus(
        jnp.einsum("btk,zk->btz", x, raw["w_var"], precision=hp) + raw["b_var"])
    qz = mean + var * eps
    rec = jnp.einsum("btz,kz->btk", qz, raw["w_rec"], precision=hp) + raw["b_rec"]
    z = mean if mean_inference else qz
    h = jnp.einsum("btz,pt->bzp", z, raw["w_p1"], precision=hp) + raw["b_p1"]
    pred = jnp.einsum("bzp,dz->bpd", h, raw["w_p2"], precision=hp) + raw["b_p2"]
    return qz, mean, var, rec, pred


# ----------------------------------------------------------------------------
if __name__ == "__main__":
    key = jax.random.PRNGKey(0)
    k_x, k_eps, k_p, k_lin, k_gx = jax.random.split(key, 5)

    # TNet-sized problem: batch=2, seq_len=16, in_dim=32, inner_t=8,
    # pred_len=4, out_dim=32.
    B, T, Din, Zt, P, Dout = 2, 16, 32, 8, 4, 32
    x_his = jax.random.normal(k_x, (B, T, Din), dtype=jnp.float32)
    eps = jax.random.normal(k_eps, (B, T, Zt), dtype=jnp.float32)  # rsample noise

    params_bf16, raw = prepare_tnet_params(k_p, Din, Zt, T, P, Dout,
                                           weight_dtype=jnp.bfloat16)
    params_f32, _ = prepare_tnet_params(k_p, Din, Zt, T, P, Dout,
                                        weight_dtype=jnp.float32)

    # ---- fused TNet linear chain: one pallas_call for the whole path -------
    outs_bf16 = tnet_linear_chain(x_his, eps, params_bf16)               # bf16 MXU feed (default)
    outs_f32 = tnet_linear_chain(x_his, eps, params_f32, compute_dtype=None)
    jax.block_until_ready((outs_bf16, outs_f32))

    refs = tnet_reference(x_his, eps, raw, mean_inference=True)
    names = ("qz", "mean", "var", "xt_rec", "xt_pred")
    for name, o, r in zip(names, outs_f32, refs):
        assert jnp.allclose(o, r, atol=1e-2, rtol=1e-2), f"f32 path mismatch: {name}"
    for name, o, r in zip(names, outs_bf16, refs):
        assert jnp.allclose(o, r, atol=5e-2, rtol=5e-2), f"bf16 path mismatch: {name}"
    assert outs_bf16[4].shape == (B, P, Dout)
    assert outs_bf16[3].shape == (B, T, Din)

    # ---- generic fused-Linear kernel coverage at a larger, MXU-sized shape --
    Mg, Kg, Ng = 128, 384, 512
    gx = jax.random.normal(k_gx, (2, Mg, Kg), dtype=jnp.float32)
    gw, gb = init_linear_params(k_lin, Kg, Ng)
    gw_kn = gw.T.astype(jnp.bfloat16)          # pre-transposed [K, N], bf16 once in HBM

    y_full = linear_forward(gx, gw_kn, gb, activation=jax.nn.relu)       # full-K path
    y_tiled = linear_forward(gx, gw_kn, gb, activation=jax.nn.relu,
                             max_resident_k=0, tk=128)                   # K-tiled accumulator path
    y_nobias = linear_forward(gx, gw_kn, None)                           # no-bias path
    jax.block_until_ready((y_full, y_tiled, y_nobias))

    gxq = gx.astype(jnp.bfloat16).astype(jnp.float32)
    gwq = gw_kn.astype(jnp.float32)
    hp = lax.Precision.HIGHEST
    y_ref_nb = jnp.einsum("bmk,kn->bmn", gxq, gwq, precision=hp)
    y_ref = jnp.maximum(y_ref_nb + gb, 0.0)
    assert jnp.allclose(y_full, y_ref, atol=5e-3, rtol=5e-3)
    assert jnp.allclose(y_tiled, y_ref, atol=5e-3, rtol=5e-3)
    assert jnp.allclose(y_nobias, y_ref_nb, atol=5e-3, rtol=5e-3)

    print("KERNEL_OK")
</pallas_src>

<mosaic_0001>
module attributes {stable_mosaic.version = 11 : i64} {
  func.func @_tnet_chain_kernel(%arg0: i32, %arg1: memref<1x16x32xf32, #tpu.memory_space<vmem>>, %arg2: memref<1x16x8xf32, #tpu.memory_space<vmem>>, %arg3: memref<32x16xbf16, #tpu.memory_space<vmem>>, %arg4: memref<1x16xf32, #tpu.memory_space<vmem>>, %arg5: memref<8x32xbf16, #tpu.memory_space<vmem>>, %arg6: memref<1x32xf32, #tpu.memory_space<vmem>>, %arg7: memref<16x4xbf16, #tpu.memory_space<vmem>>, %arg8: memref<1x4xf32, #tpu.memory_space<vmem>>, %arg9: memref<8x32xbf16, #tpu.memory_space<vmem>>, %arg10: memref<1x32xf32, #tpu.memory_space<vmem>>, %arg11: memref<1x16x8xf32, #tpu.memory_space<vmem>>, %arg12: memref<1x16x8xf32, #tpu.memory_space<vmem>>, %arg13: memref<1x16x8xf32, #tpu.memory_space<vmem>>, %arg14: memref<1x16x32xf32, #tpu.memory_space<vmem>>, %arg15: memref<1x4x32xf32, #tpu.memory_space<vmem>>) attributes {dimension_semantics = [#tpu.dimension_semantics<parallel>], iteration_bounds = array<i64: 2>, scalar_prefetch = 0 : i64, scratch_operands = 0 : i64, tpu.core_type = #tpu.core_type<tc>, window_params = [{transform_indices = @transform_0, window_bounds = array<i64: 1, 16, 32>}, {transform_indices = @transform_1, window_bounds = array<i64: 1, 16, 8>}, {pipeline_mode = #tpu.pipeline_mode<synchronous>, transform_indices = @transform_2, window_bounds = array<i64: 32, 16>}, {pipeline_mode = #tpu.pipeline_mode<synchronous>, transform_indices = @transform_3, window_bounds = array<i64: 1, 16>}, {pipeline_mode = #tpu.pipeline_mode<synchronous>, transform_indices = @transform_4, window_bounds = array<i64: 8, 32>}, {pipeline_mode = #tpu.pipeline_mode<synchronous>, transform_indices = @transform_5, window_bounds = array<i64: 1, 32>}, {pipeline_mode = #tpu.pipeline_mode<synchronous>, transform_indices = @transform_6, window_bounds = array<i64: 16, 4>}, {pipeline_mode = #tpu.pipeline_mode<synchronous>, transform_indices = @transform_7, window_bounds = array<i64: 1, 4>}, {pipeline_mode = #tpu.pipeline_mode<synchronous>, transform_indices = @transform_8, window_bounds = array<i64: 8, 32>}, {pipeline_mode = #tpu.pipeline_mode<synchronous>, transform_indices = @transform_9, window_bounds = array<i64: 1, 32>}, {transform_indices = @transform_10, window_bounds = array<i64: 1, 16, 8>}, {transform_indices = @transform_11, window_bounds = array<i64: 1, 16, 8>}, {transform_indices = @transform_12, window_bounds = array<i64: 1, 16, 8>}, {transform_indices = @transform_13, window_bounds = array<i64: 1, 16, 32>}, {transform_indices = @transform_14, window_bounds = array<i64: 1, 4, 32>}]} {
    %c0 = arith.constant 0 : index
    %c0_0 = arith.constant 0 : index
    %c0_1 = arith.constant 0 : index
    %0 = vector.load %arg1[%c0, %c0_0, %c0_1] : memref<1x16x32xf32, #tpu.memory_space<vmem>>, vector<1x16x32xf32>
    %1 = vector.shape_cast %0 : vector<1x16x32xf32> to vector<16x32xf32>
    %2 = arith.truncf %1 : vector<16x32xf32> to vector<16x32xbf16>
    %c0_2 = arith.constant 0 : index
    %c0_3 = arith.constant 0 : index
    %3 = vector.load %arg3[%c0_2, %c0_3] : memref<32x16xbf16, #tpu.memory_space<vmem>>, vector<32x16xbf16>
    %cst = arith.constant dense<0.000000e+00> : vector<16x16xf32>
    %4 = tpu.matmul %2, %3, %cst {dimension_numbers = #tpu.dot_dimension_numbers<[1], [0], [0], [1], [0, 0, 1, 1], [], []>} : vector<16x32xbf16>, vector<32x16xbf16>, vector<16x16xf32> -> vector<16x16xf32>
    %c0_4 = arith.constant 0 : index
    %c0_5 = arith.constant 0 : index
    %5 = vector.load %arg4[%c0_4, %c0_5] : memref<1x16xf32, #tpu.memory_space<vmem>>, vector<1x16xf32>
    %6 = vector.broadcast %5 : vector<1x16xf32> to vector<16x16xf32>
    %7 = arith.addf %4, %6 : vector<16x16xf32>
    %8 = vector.extract_strided_slice %7 {offsets = [0, 0], sizes = [16, 8], strides = [1, 1]} : vector<16x16xf32> to vector<16x8xf32>
    %9 = vector.extract_strided_slice %7 {offsets = [0, 8], sizes = [16, 8], strides = [1, 1]} : vector<16x16xf32> to vector<16x8xf32>
    %cst_6 = arith.constant 0.000000e+00 : f32
    %10 = vector.broadcast %cst_6 : f32 to vector<16x8xf32>
    %11 = arith.maximumf %9, %10 : vector<16x8xf32>
    %12 = vector.broadcast %cst_6 : f32 to vector<16x8xf32>
    %13 = arith.subf %9, %12 : vector<16x8xf32>
    %14 = arith.cmpf one, %13, %13 : vector<16x8xf32>
    %15 = vector.broadcast %cst_6 : f32 to vector<16x8xf32>
    %16 = arith.addf %9, %15 : vector<16x8xf32>
    %17 = math.absf %13 : vector<16x8xf32>
    %cst_7 = arith.constant 0.000000e+00 : f32
    %18 = vector.broadcast %cst_7 : f32 to vector<16x8xf32>
    %19 = arith.subf %18, %17 : vector<16x8xf32>
    %20 = math.exp %19 : vector<16x8xf32>
    %21 = math.log1p %20 : vector<16x8xf32>
    %22 = arith.addf %11, %21 : vector<16x8xf32>
    %23 = arith.select %14, %16, %22 : vector<16x8xi1>, vector<16x8xf32>
    %c0_8 = arith.constant 0 : index
    %c0_9 = arith.constant 0 : index
    %c0_10 = arith.constant 0 : index
    %24 = vector.load %arg2[%c0_8, %c0_9, %c0_10] : memref<1x16x8xf32, #tpu.memory_space<vmem>>, vector<1x16x8xf32>
    %25 = vector.shape_cast %24 : vector<1x16x8xf32> to vector<16x8xf32>
    %26 = arith.mulf %23, %25 : vector<16x8xf32>
    %27 = arith.addf %8, %26 : vector<16x8xf32>
    %c0_11 = arith.constant 0 : index
    %c0_12 = arith.constant 0 : index
    %c0_13 = arith.constant 0 : index
    %28 = vector.load %arg12[%c0_11, %c0_12, %c0_13] : memref<1x16x8xf32, #tpu.memory_space<vmem>>, vector<1x16x8xf32>
    %29 = vector.shape_cast %28 : vector<1x16x8xf32> to vector<16x8xf32>
    %30 = vector.shape_cast %8 : vector<16x8xf32> to vector<1x16x8xf32>
    tpu.vector_store %arg12[%c0_11, %c0_12, %c0_13], %30 {strides = array<i32>} : memref<1x16x8xf32, #tpu.memory_space<vmem>>, vector<1x16x8xf32>,
    %c0_14 = arith.constant 0 : index
    %c0_15 = arith.constant 0 : index
    %c0_16 = arith.constant 0 : index
    %31 = vector.load %arg13[%c0_14, %c0_15, %c0_16] : memref<1x16x8xf32, #tpu.memory_space<vmem>>, vector<1x16x8xf32>
    %32 = vector.shape_cast %31 : vector<1x16x8xf32> to vector<16x8xf32>
    %33 = vector.shape_cast %23 : vector<16x8xf32> to vector<1x16x8xf32>
    tpu.vector_store %arg13[%c0_14, %c0_15, %c0_16], %33 {strides = array<i32>} : memref<1x16x8xf32, #tpu.memory_space<vmem>>, vector<1x16x8xf32>,
    %c0_17 = arith.constant 0 : index
    %c0_18 = arith.constant 0 : index
    %c0_19 = arith.constant 0 : index
    %34 = vector.load %arg11[%c0_17, %c0_18, %c0_19] : memref<1x16x8xf32, #tpu.memory_space<vmem>>, vector<1x16x8xf32>
    %35 = vector.shape_cast %34 : vector<1x16x8xf32> to vector<16x8xf32>
    %36 = vector.shape_cast %27 : vector<16x8xf32> to vector<1x16x8xf32>
    tpu.vector_store %arg11[%c0_17, %c0_18, %c0_19], %36 {strides = array<i32>} : memref<1x16x8xf32, #tpu.memory_space<vmem>>, vector<1x16x8xf32>,
    %37 = arith.truncf %27 : vector<16x8xf32> to vector<16x8xbf16>
    %c0_20 = arith.constant 0 : index
    %c0_21 = arith.constant 0 : index
    %38 = vector.load %arg5[%c0_20, %c0_21] : memref<8x32xbf16, #tpu.memory_space<vmem>>, vector<8x32xbf16>
    %cst_22 = arith.constant dense<0.000000e+00> : vector<16x32xf32>
    %39 = tpu.matmul %37, %38, %cst_22 {dimension_numbers = #tpu.dot_dimension_numbers<[1], [0], [0], [1], [0, 0, 1, 1], [], []>} : vector<16x8xbf16>, vector<8x32xbf16>, vector<16x32xf32> -> vector<16x32xf32>
    %c0_23 = arith.constant 0 : index
    %c0_24 = arith.constant 0 : index
    %40 = vector.load %arg6[%c0_23, %c0_24] : memref<1x32xf32, #tpu.memory_space<vmem>>, vector<1x32xf32>
    %41 = vector.broadcast %40 : vector<1x32xf32> to vector<16x32xf32>
    %42 = arith.addf %39, %41 : vector<16x32xf32>
    %c0_25 = arith.constant 0 : index
    %c0_26 = arith.constant 0 : index
    %c0_27 = arith.constant 0 : index
    %43 = vector.load %arg14[%c0_25, %c0_26, %c0_27] : memref<1x16x32xf32, #tpu.memory_space<vmem>>, vector<1x16x32xf32>
    %44 = vector.shape_cast %43 : vector<1x16x32xf32> to vector<16x32xf32>
    %45 = vector.shape_cast %42 : vector<16x32xf32> to vector<1x16x32xf32>
    tpu.vector_store %arg14[%c0_25, %c0_26, %c0_27], %45 {strides = array<i32>} : memref<1x16x32xf32, #tpu.memory_space<vmem>>, vector<1x16x32xf32>,
    %46 = arith.truncf %8 : vector<16x8xf32> to vector<16x8xbf16>
    %c0_28 = arith.constant 0 : index
    %c0_29 = arith.constant 0 : index
    %47 = vector.load %arg7[%c0_28, %c0_29] : memref<16x4xbf16, #tpu.memory_space<vmem>>, vector<16x4xbf16>
    %cst_30 = arith.constant dense<0.000000e+00> : vector<8x4xf32>
    %48 = tpu.matmul %46, %47, %cst_30 {dimension_numbers = #tpu.dot_dimension_numbers<[0], [0], [1], [1], [0, 1, 1, 1], [], []>} : vector<16x8xbf16>, vector<16x4xbf16>, vector<8x4xf32> -> vector<8x4xf32>
    %c0_31 = arith.constant 0 : index
    %c0_32 = arith.constant 0 : index
    %49 = vector.load %arg8[%c0_31, %c0_32] : memref<1x4xf32, #tpu.memory_space<vmem>>, vector<1x4xf32>
    %50 = vector.broadcast %49 : vector<1x4xf32> to vector<8x4xf32>
    %51 = arith.addf %48, %50 : vector<8x4xf32>
    %52 = arith.truncf %51 : vector<8x4xf32> to vector<8x4xbf16>
    %c0_33 = arith.constant 0 : index
    %c0_34 = arith.constant 0 : index
    %53 = vector.load %arg9[%c0_33, %c0_34] : memref<8x32xbf16, #tpu.memory_space<vmem>>, vector<8x32xbf16>
    %cst_35 = arith.constant dense<0.000000e+00> : vector<4x32xf32>
    %54 = tpu.matmul %52, %53, %cst_35 {dimension_numbers = #tpu.dot_dimension_numbers<[0], [0], [1], [1], [0, 1, 1, 1], [], []>} : vector<8x4xbf16>, vector<8x32xbf16>, vector<4x32xf32> -> vector<4x32xf32>
    %c0_36 = arith.constant 0 : index
    %c0_37 = arith.constant 0 : index
    %55 = vector.load %arg10[%c0_36, %c0_37] : memref<1x32xf32, #tpu.memory_space<vmem>>, vector<1x32xf32>
    %56 = vector.broadcast %55 : vector<1x32xf32> to vector<4x32xf32>
    %57 = arith.addf %54, %56 : vector<4x32xf32>
    %c0_38 = arith.constant 0 : index
    %c0_39 = arith.constant 0 : index
    %c0_40 = arith.constant 0 : index
    %58 = vector.load %arg15[%c0_38, %c0_39, %c0_40] : memref<1x4x32xf32, #tpu.memory_space<vmem>>, vector<1x4x32xf32>
    %59 = vector.shape_cast %58 : vector<1x4x32xf32> to vector<4x32xf32>
    %60 = vector.shape_cast %57 : vector<4x32xf32> to vector<1x4x32xf32>
    tpu.vector_store %arg15[%c0_38, %c0_39, %c0_40], %60 {strides = array<i32>} : memref<1x4x32xf32, #tpu.memory_space<vmem>>, vector<1x4x32xf32>,
    return
  }
  func.func @transform_0(%arg0: i32) -> (i32, i32, i32) {
    %c0_i32 = arith.constant 0 : i32
    %c0_i32_0 = arith.constant 0 : i32
    %c0_i32_1 = arith.constant 0 : i32
    return %arg0, %c0_i32, %c0_i32_0 : i32, i32, i32
  }
  func.func @transform_1(%arg0: i32) -> (i32, i32, i32) {
    %c0_i32 = arith.constant 0 : i32
    %c0_i32_0 = arith.constant 0 : i32
    %c0_i32_1 = arith.constant 0 : i32
    return %arg0, %c0_i32, %c0_i32_0 : i32, i32, i32
  }
  func.func @transform_2(%arg0: i32) -> (i32, i32) {
    %c0_i32 = arith.constant 0 : i32
    %c0_i32_0 = arith.constant 0 : i32
    %c0_i32_1 = arith.constant 0 : i32
    return %c0_i32, %c0_i32_0 : i32, i32
  }
  func.func @transform_3(%arg0: i32) -> (i32, i32) {
    %c0_i32 = arith.constant 0 : i32
    %c0_i32_0 = arith.constant 0 : i32
    %c0_i32_1 = arith.constant 0 : i32
    return %c0_i32, %c0_i32_0 : i32, i32
  }
  func.func @transform_4(%arg0: i32) -> (i32, i32) {
    %c0_i32 = arith.constant 0 : i32
    %c0_i32_0 = arith.constant 0 : i32
    %c0_i32_1 = arith.constant 0 : i32
    return %c0_i32, %c0_i32_0 : i32, i32
  }
  func.func @transform_5(%arg0: i32) -> (i32, i32) {
    %c0_i32 = arith.constant 0 : i32
    %c0_i32_0 = arith.constant 0 : i32
    %c0_i32_1 = arith.constant 0 : i32
    return %c0_i32, %c0_i32_0 : i32, i32
  }
  func.func @transform_6(%arg0: i32) -> (i32, i32) {
    %c0_i32 = arith.constant 0 : i32
    %c0_i32_0 = arith.constant 0 : i32
    %c0_i32_1 = arith.constant 0 : i32
    return %c0_i32, %c0_i32_0 : i32, i32
  }
  func.func @transform_7(%arg0: i32) -> (i32, i32) {
    %c0_i32 = arith.constant 0 : i32
    %c0_i32_0 = arith.constant 0 : i32
    %c0_i32_1 = arith.constant 0 : i32
    return %c0_i32, %c0_i32_0 : i32, i32
  }
  func.func @transform_8(%arg0: i32) -> (i32, i32) {
    %c0_i32 = arith.constant 0 : i32
    %c0_i32_0 = arith.constant 0 : i32
    %c0_i32_1 = arith.constant 0 : i32
    return %c0_i32, %c0_i32_0 : i32, i32
  }
  func.func @transform_9(%arg0: i32) -> (i32, i32) {
    %c0_i32 = arith.constant 0 : i32
    %c0_i32_0 = arith.constant 0 : i32
    %c0_i32_1 = arith.constant 0 : i32
    return %c0_i32, %c0_i32_0 : i32, i32
  }
  func.func @transform_10(%arg0: i32) -> (i32, i32, i32) {
    %c0_i32 = arith.constant 0 : i32
    %c0_i32_0 = arith.constant 0 : i32
    %c0_i32_1 = arith.constant 0 : i32
    return %arg0, %c0_i32, %c0_i32_0 : i32, i32, i32
  }
  func.func @transform_11(%arg0: i32) -> (i32, i32, i32) {
    %c0_i32 = arith.constant 0 : i32
    %c0_i32_0 = arith.constant 0 : i32
    %c0_i32_1 = arith.constant 0 : i32
    return %arg0, %c0_i32, %c0_i32_0 : i32, i32, i32
  }
  func.func @transform_12(%arg0: i32) -> (i32, i32, i32) {
    %c0_i32 = arith.constant 0 : i32
    %c0_i32_0 = arith.constant 0 : i32
    %c0_i32_1 = arith.constant 0 : i32
    return %arg0, %c0_i32, %c0_i32_0 : i32, i32, i32
  }
  func.func @transform_13(%arg0: i32) -> (i32, i32, i32) {
    %c0_i32 = arith.constant 0 : i32
    %c0_i32_0 = arith.constant 0 : i32
    %c0_i32_1 = arith.constant 0 : i32
    return %arg0, %c0_i32, %c0_i32_0 : i32, i32, i32
  }
  func.func @transform_14(%arg0: i32) -> (i32, i32, i32) {
    %c0_i32 = arith.constant 0 : i32
    %c0_i32_0 = arith.constant 0 : i32
    %c0_i32_1 = arith.constant 0 : i32
    return %arg0, %c0_i32, %c0_i32_0 : i32, i32, i32
  }
}

</mosaic_0001>

<llo_original>
// kernel: tpu_custom_call.1
$region0: #{tpu_custom_call.1}
  #allocation0 [shape = 'u32[]', space=smem, size = 0x4, offset = 0x4, fixed_abs, tag = 'smem constant byte address 0x4 - core index']
  #allocation1 [shape = 'u32[144,128]{1,0:T(1,128)}', space=vmem, size = 0x12000, scoped, tag = 'internal scratch']
  %s0 = inlined_call_operand.vmem [shape: f32[2,16,32], index: 0, kind: input, shape index: {}]
  %s1 = inlined_call_operand.vmem [shape: f32[2,16,8], index: 1, kind: input, shape index: {}]
  %s2 = inlined_call_operand.vmem [shape: bf16[32,16], index: 2, kind: input, shape index: {}]
  %s3 = inlined_call_operand.vmem [shape: f32[1,16], index: 3, kind: input, shape index: {}]
  %s4 = inlined_call_operand.vmem [shape: bf16[8,32], index: 4, kind: input, shape index: {}]
  %s5 = inlined_call_operand.vmem [shape: f32[1,32], index: 5, kind: input, shape index: {}]
  %s6 = inlined_call_operand.vmem [shape: bf16[16,4], index: 6, kind: input, shape index: {}]
  %s7 = inlined_call_operand.vmem [shape: f32[1,4], index: 7, kind: input, shape index: {}]
  %s8 = inlined_call_operand.vmem [shape: bf16[8,32], index: 8, kind: input, shape index: {}]
  %s9 = inlined_call_operand.vmem [shape: f32[1,32], index: 9, kind: input, shape index: {}]
  %s10 = inlined_call_operand.vmem [shape: f32[2,16,8], index: 10, kind: output, shape index: {0}]
  %s11 = inlined_call_operand.vmem [shape: f32[2,16,8], index: 11, kind: output, shape index: {1}]
  %s12 = inlined_call_operand.vmem [shape: f32[2,16,8], index: 12, kind: output, shape index: {2}]
  %s13 = inlined_call_operand.hbm [shape: f32[2,16,32], index: 13, kind: output, shape index: {3}]
  %s14 = inlined_call_operand.hbm [shape: f32[2,4,32], index: 14, kind: output, shape index: {4}]
  %15 = xla_tuple %s10, %s11, %s12, %s13, %s14
  %s16 = sld [smem:[#allocation0]]
  $region105: #{tpu_custom_call.1} parent=0
    _
  %s18 = ssub.s32 1, %s16
  %s19 = scalar_select 0, %s18, %s16
  $region1: #{tpu_custom_call.1} parent=0
    #allocation2 [shape = 'u8[16384]{0}', space=vmem, size = 0x4000, scoped, tag = 'output window, operand 3']
    #allocation3 [shape = 's32[2]{0}', space=sflag, size = 0x8, scoped, tag = 'scoped memory for tpu_custom_call.1']
    #allocation4 [shape = 'u8[4096]{0}', space=vmem, size = 0x1000, scoped, tag = 'output window, operand 4']
    #allocation5 [shape = 's32[2]{0}', space=sflag, size = 0x8, scoped, tag = 'scoped memory for tpu_custom_call.1']
    %20 = vsyncpa [#allocation3], 0
    %s21 = scalar_lea.sflag [#allocation3], 1
    %22 = vsyncpa %s21, 0
    %23 = vsyncpa [#allocation5], 0
    %s24 = scalar_lea.sflag [#allocation5], 1
    %25 = vsyncpa %s24, 0
    loop: start=0, step=1, limit=4
    $region2: #{tpu_custom_call.1} parent=1 // loop_pre_header
      _
    $region3: #{tpu_custom_call.1} parent=1 // loop_header
      %s27 = sphi 0, %s31
      %p28 = scmp.ge.s32.totalorder %s27, 4
      %s37 = sphi 0, %s39
      %s40 = sphi 0, %s37
      %s41 = sphi 0, %s40
      %s57 = sphi 0, %s41
      %s63 = sphi 0, %s65
      %s66 = sphi 0, %s63
      %s67 = sphi 0, %s66
      %s83 = sphi 0, %s67
      %s87 = sphi 0, %s87
      %s89 = sphi 0, %s87
      %s90 = sphi 0, %s89
      %s104 = sphi 0, %s90
      %s108 = sphi 0, %s108
      %s110 = sphi 0, %s108
      %s111 = sphi 0, %s110
      %s125 = sphi 0, %s111
      %s129 = sphi 0, %s129
      %s131 = sphi 0, %s129
      %s132 = sphi 0, %s131
      %s146 = sphi 0, %s132
      %s150 = sphi 0, %s150
      %s152 = sphi 0, %s150
      %s153 = sphi 0, %s152
      %s167 = sphi 0, %s153
      %s171 = sphi 0, %s171
      %s173 = sphi 0, %s171
      %s174 = sphi 0, %s173
      %s188 = sphi 0, %s174
      %s192 = sphi 0, %s192
      %s194 = sphi 0, %s192
      %s195 = sphi 0, %s194
      %s209 = sphi 0, %s195
      %s213 = sphi 0, %s213
      %s215 = sphi 0, %s213
      %s216 = sphi 0, %s215
      %s230 = sphi 0, %s216
      %s234 = sphi 0, %s234
      %s236 = sphi 0, %s234
      %s237 = sphi 0, %s236
      %s251 = sphi 0, %s237
      %s257 = sphi 0, %s259
      %s260 = sphi 0, %s257
      %s261 = sphi 0, %s260
      %s277 = sphi 0, %s261
      %s283 = sphi 0, %s285
      %s286 = sphi 0, %s283
      %s287 = sphi 0, %s286
      %s303 = sphi 0, %s287
      %s309 = sphi 0, %s311
      %s312 = sphi 0, %s309
      %s313 = sphi 0, %s312
      %s329 = sphi 0, %s313
      %s335 = sphi 0, %s337
      %s338 = sphi 0, %s335
      %s339 = sphi 0, %s338
      %s355 = sphi 0, %s339
      %s361 = sphi 0, %s363
      %s364 = sphi 0, %s361
      %s365 = sphi 0, %s364
      %s381 = sphi 0, %s365
    $region4: #{tpu_custom_call.1} parent=1 // loop_header_branch
      %30 = sbr.rel (%p28) target = $region8
    $region5: #{tpu_custom_call.1} parent=1 // loop_body
      %s32 = ssub.s32 %s27, 1
      %s33 = ssub.s32 %s27, 2
      %s34 = sadd.s32 %s27, 1
      %s35 = ssub.s32 %s27, %s34
      %p36 = scmp.eq.s32.totalorder %s35, 0
      %s38 = sadd.s32 %s37, 1
      %s39 = scalar_select %p36, %s37, %s38
      %p42 = pneg %p36
      %p43 = scmp.eq.s32.totalorder %s27, 1
      %p44 = por %p42, %p43
      %p45 = scmp.ne.s32.totalorder %s37, %s40
      %p46 = scmp.eq.s32.totalorder %s27, 0
      %p47 = por %p45, %p46
      %p48 = scmp.ne.s32.totalorder %s37, %s40
      %p49 = scmp.eq.s32.totalorder %s32, 1
      %p50 = por %p48, %p49
      %p51 = scmp.ne.s32.totalorder %s40, %s41
      %p52 = scmp.eq.s32.totalorder %s32, 0
      %p53 = por %p51, %p52
      %p54 = scmp.ne.s32.totalorder %s40, %s41
      %p55 = scmp.eq.s32.totalorder %s33, 1
      %p56 = por %p54, %p55
      %p58 = scmp.ne.s32.totalorder %s41, %s57
      %p59 = scmp.eq.s32.totalorder %s33, 0
      %p60 = por %p58, %p59
      %s61 = ssub.s32 %s27, %s34
      %p62 = scmp.eq.s32.totalorder %s61, 0
      %s64 = sadd.s32 %s63, 1
      %s65 = scalar_select %p62, %s63, %s64
      %p68 = pneg %p62
      %p69 = scmp.eq.s32.totalorder %s27, 1
      %p70 = por %p68, %p69
      %p71 = scmp.ne.s32.totalorder %s63, %s66
      %p72 = scmp.eq.s32.totalorder %s27, 0
      %p73 = por %p71, %p72
      %p74 = scmp.ne.s32.totalorder %s63, %s66
      %p75 = scmp.eq.s32.totalorder %s32, 1
      %p76 = por %p74, %p75
      %p77 = scmp.ne.s32.totalorder %s66, %s67
      %p78 = scmp.eq.s32.totalorder %s32, 0
      %p79 = por %p77, %p78
      %p80 = scmp.ne.s32.totalorder %s66, %s67
      %p81 = scmp.eq.s32.totalorder %s33, 1
      %p82 = por %p80, %p81
      %p84 = scmp.ne.s32.totalorder %s67, %s83
      %p85 = scmp.eq.s32.totalorder %s33, 0
      %p86 = por %p84, %p85
      %s88 = sadd.s32 %s87, 1
      %p91 = scmp.eq.s32.totalorder %s27, 1
      %p92 = scmp.ne.s32.totalorder %s87, %s89
      %p93 = scmp.eq.s32.totalorder %s27, 0
      %p94 = por %p92, %p93
      %p95 = scmp.ne.s32.totalorder %s87, %s89
      %p96 = scmp.eq.s32.totalorder %s32, 1
      %p97 = por %p95, %p96
      %p98 = scmp.ne.s32.totalorder %s89, %s90
      %p99 = scmp.eq.s32.totalorder %s32, 0
      %p100 = por %p98, %p99
      %p101 = scmp.ne.s32.totalorder %s89, %s90
      %p102 = scmp.eq.s32.totalorder %s33, 1
      %p103 = por %p101, %p102
      %p105 = scmp.ne.s32.totalorder %s90, %s104
      %p106 = scmp.eq.s32.totalorder %s33, 0
      %p107 = por %p105, %p106
      %s109 = sadd.s32 %s108, 1
      %p112 = scmp.eq.s32.totalorder %s27, 1
      %p113 = scmp.ne.s32.totalorder %s108, %s110
      %p114 = scmp.eq.s32.totalorder %s27, 0
      %p115 = por %p113, %p114
      %p116 = scmp.ne.s32.totalorder %s108, %s110
      %p117 = scmp.eq.s32.totalorder %s32, 1
      %p118 = por %p116, %p117
      %p119 = scmp.ne.s32.totalorder %s110, %s111
      %p120 = scmp.eq.s32.totalorder %s32, 0
      %p121 = por %p119, %p120
      %p122 = scmp.ne.s32.totalorder %s110, %s111
      %p123 = scmp.eq.s32.totalorder %s33, 1
      %p124 = por %p122, %p123
      %p126 = scmp.ne.s32.totalorder %s111, %s125
      %p127 = scmp.eq.s32.totalorder %s33, 0
      %p128 = por %p126, %p127
      %s130 = sadd.s32 %s129, 1
      %p133 = scmp.eq.s32.totalorder %s27, 1
      %p134 = scmp.ne.s32.totalorder %s129, %s131
      %p135 = scmp.eq.s32.totalorder %s27, 0
      %p136 = por %p134, %p135
      %p137 = scmp.ne.s32.totalorder %s129, %s131
      %p138 = scmp.eq.s32.totalorder %s32, 1
      %p139 = por %p137, %p138
      %p140 = scmp.ne.s32.totalorder %s131, %s132
      %p141 = scmp.eq.s32.totalorder %s32, 0
      %p142 = por %p140, %p141
      %p143 = scmp.ne.s32.totalorder %s131, %s132
      %p144 = scmp.eq.s32.totalorder %s33, 1
      %p145 = por %p143, %p144
      %p147 = scmp.ne.s32.totalorder %s132, %s146
      %p148 = scmp.eq.s32.totalorder %s33, 0
      %p149 = por %p147, %p148
      %s151 = sadd.s32 %s150, 1
      %p154 = scmp.eq.s32.totalorder %s27, 1
      %p155 = scmp.ne.s32.totalorder %s150, %s152
      %p156 = scmp.eq.s32.totalorder %s27, 0
      %p157 = por %p155, %p156
      %p158 = scmp.ne.s32.totalorder %s150, %s152
      %p159 = scmp.eq.s32.totalorder %s32, 1
      %p160 = por %p158, %p159
      %p161 = scmp.ne.s32.totalorder %s152, %s153
      %p162 = scmp.eq.s32.totalorder %s32, 0
      %p163 = por %p161, %p162
      %p164 = scmp.ne.s32.totalorder %s152, %s153
      %p165 = scmp.eq.s32.totalorder %s33, 1
      %p166 = por %p164, %p165
      %p168 = scmp.ne.s32.totalorder %s153, %s167
      %p169 = scmp.eq.s32.totalorder %s33, 0
      %p170 = por %p168, %p169
      %s172 = sadd.s32 %s171, 1
      %p175 = scmp.eq.s32.totalorder %s27, 1
      %p176 = scmp.ne.s32.totalorder %s171, %s173
      %p177 = scmp.eq.s32.totalorder %s27, 0
      %p178 = por %p176, %p177
      %p179 = scmp.ne.s32.totalorder %s171, %s173
      %p180 = scmp.eq.s32.totalorder %s32, 1
      %p181 = por %p179, %p180
      %p182 = scmp.ne.s32.totalorder %s173, %s174
      %p183 = scmp.eq.s32.totalorder %s32, 0
      %p184 = por %p182, %p183
      %p185 = scmp.ne.s32.totalorder %s173, %s174
      %p186 = scmp.eq.s32.totalorder %s33, 1
      %p187 = por %p185, %p186
      %p189 = scmp.ne.s32.totalorder %s174, %s188
      %p190 = scmp.eq.s32.totalorder %s33, 0
      %p191 = por %p189, %p190
      %s193 = sadd.s32 %s192, 1
      %p196 = scmp.eq.s32.totalorder %s27, 1
      %p197 = scmp.ne.s32.totalorder %s192, %s194
      %p198 = scmp.eq.s32.totalorder %s27, 0
      %p199 = por %p197, %p198
      %p200 = scmp.ne.s32.totalorder %s192, %s194
      %p201 = scmp.eq.s32.totalorder %s32, 1
      %p202 = por %p200, %p201
      %p203 = scmp.ne.s32.totalorder %s194, %s195
      %p204 = scmp.eq.s32.totalorder %s32, 0
      %p205 = por %p203, %p204
      %p206 = scmp.ne.s32.totalorder %s194, %s195
      %p207 = scmp.eq.s32.totalorder %s33, 1
      %p208 = por %p206, %p207
      %p210 = scmp.ne.s32.totalorder %s195, %s209
      %p211 = scmp.eq.s32.totalorder %s33, 0
      %p212 = por %p210, %p211
      %s214 = sadd.s32 %s213, 1
      %p217 = scmp.eq.s32.totalorder %s27, 1
      %p218 = scmp.ne.s32.totalorder %s213, %s215
      %p219 = scmp.eq.s32.totalorder %s27, 0
      %p220 = por %p218, %p219
      %p221 = scmp.ne.s32.totalorder %s213, %s215
      %p222 = scmp.eq.s32.totalorder %s32, 1
      %p223 = por %p221, %p222
      %p224 = scmp.ne.s32.totalorder %s215, %s216
      %p225 = scmp.eq.s32.totalorder %s32, 0
      %p226 = por %p224, %p225
      %p227 = scmp.ne.s32.totalorder %s215, %s216
      %p228 = scmp.eq.s32.totalorder %s33, 1
      %p229 = por %p227, %p228
      %p231 = scmp.ne.s32.totalorder %s216, %s230
      %p232 = scmp.eq.s32.totalorder %s33, 0
      %p233 = por %p231, %p232
      %s235 = sadd.s32 %s234, 1
      %p238 = scmp.eq.s32.totalorder %s27, 1
      %p239 = scmp.ne.s32.totalorder %s234, %s236
      %p240 = scmp.eq.s32.totalorder %s27, 0
      %p241 = por %p239, %p240
      %p242 = scmp.ne.s32.totalorder %s234, %s236
      %p243 = scmp.eq.s32.totalorder %s32, 1
      %p244 = por %p242, %p243
      %p245 = scmp.ne.s32.totalorder %s236, %s237
      %p246 = scmp.eq.s32.totalorder %s32, 0
      %p247 = por %p245, %p246
      %p248 = scmp.ne.s32.totalorder %s236, %s237
      %p249 = scmp.eq.s32.totalorder %s33, 1
      %p250 = por %p248, %p249
      %p252 = scmp.ne.s32.totalorder %s237, %s251
      %p253 = scmp.eq.s32.totalorder %s33, 0
      %p254 = por %p252, %p253
      %s255 = ssub.s32 %s27, %s34
      %p256 = scmp.eq.s32.totalorder %s255, 0
      %s258 = sadd.s32 %s257, 1
      %s259 = scalar_select %p256, %s257, %s258
      %p262 = pneg %p256
      %p263 = scmp.eq.s32.totalorder %s27, 1
      %p264 = por %p262, %p263
      %p265 = scmp.ne.s32.totalorder %s257, %s260
      %p266 = scmp.eq.s32.totalorder %s27, 0
      %p267 = por %p265, %p266
      %p268 = scmp.ne.s32.totalorder %s257, %s260
      %p269 = scmp.eq.s32.totalorder %s32, 1
      %p270 = por %p268, %p269
      %p271 = scmp.ne.s32.totalorder %s260, %s261
      %p272 = scmp.eq.s32.totalorder %s32, 0
      %p273 = por %p271, %p272
      %p274 = scmp.ne.s32.totalorder %s260, %s261
      %p275 = scmp.eq.s32.totalorder %s33, 1
      %p276 = por %p274, %p275
      %p278 = scmp.ne.s32.totalorder %s261, %s277
      %p279 = scmp.eq.s32.totalorder %s33, 0
      %p280 = por %p278, %p279
      %s281 = ssub.s32 %s27, %s34
      %p282 = scmp.eq.s32.totalorder %s281, 0
      %s284 = sadd.s32 %s283, 1
      %s285 = scalar_select %p282, %s283, %s284
      %p288 = pneg %p282
      %p289 = scmp.eq.s32.totalorder %s27, 1
      %p290 = por %p288, %p289
      %p291 = scmp.ne.s32.totalorder %s283, %s286
      %p292 = scmp.eq.s32.totalorder %s27, 0
      %p293 = por %p291, %p292
      %p294 = scmp.ne.s32.totalorder %s283, %s286
      %p295 = scmp.eq.s32.totalorder %s32, 1
      %p296 = por %p294, %p295
      %p297 = scmp.ne.s32.totalorder %s286, %s287
      %p298 = scmp.eq.s32.totalorder %s32, 0
      %p299 = por %p297, %p298
      %p300 = scmp.ne.s32.totalorder %s286, %s287
      %p301 = scmp.eq.s32.totalorder %s33, 1
      %p302 = por %p300, %p301
      %p304 = scmp.ne.s32.totalorder %s287, %s303
      %p305 = scmp.eq.s32.totalorder %s33, 0
      %p306 = por %p304, %p305
      %s307 = ssub.s32 %s27, %s34
      %p308 = scmp.eq.s32.totalorder %s307, 0
      %s310 = sadd.s32 %s309, 1
      %s311 = scalar_select %p308, %s309, %s310
      %p314 = pneg %p308
      %p315 = scmp.eq.s32.totalorder %s27, 1
      %p316 = por %p314, %p315
      %p317 = scmp.ne.s32.totalorder %s309, %s312
      %p318 = scmp.eq.s32.totalorder %s27, 0
      %p319 = por %p317, %p318
      %p320 = scmp.ne.s32.totalorder %s309, %s312
      %p321 = scmp.eq.s32.totalorder %s32, 1
      %p322 = por %p320, %p321
      %p323 = scmp.ne.s32.totalorder %s312, %s313
      %p324 = scmp.eq.s32.totalorder %s32, 0
      %p325 = por %p323, %p324
      %p326 = scmp.ne.s32.totalorder %s312, %s313
      %p327 = scmp.eq.s32.totalorder %s33, 1
      %p328 = por %p326, %p327
      %p330 = scmp.ne.s32.totalorder %s313, %s329
      %p331 = scmp.eq.s32.totalorder %s33, 0
      %p332 = por %p330, %p331
      %s333 = ssub.s32 %s27, %s34
      %p334 = scmp.eq.s32.totalorder %s333, 0
      %s336 = sadd.s32 %s335, 1
      %s337 = scalar_select %p334, %s335, %s336
      %p340 = pneg %p334
      %p341 = scmp.eq.s32.totalorder %s27, 1
      %p342 = por %p340, %p341
      %p343 = scmp.ne.s32.totalorder %s335, %s338
      %p344 = scmp.eq.s32.totalorder %s27, 0
      %p345 = por %p343, %p344
      %p346 = scmp.ne.s32.totalorder %s335, %s338
      %p347 = scmp.eq.s32.totalorder %s32, 1
      %p348 = por %p346, %p347
      %p349 = scmp.ne.s32.totalorder %s338, %s339
      %p350 = scmp.eq.s32.totalorder %s32, 0
      %p351 = por %p349, %p350
      %p352 = scmp.ne.s32.totalorder %s338, %s339
      %p353 = scmp.eq.s32.totalorder %s33, 1
      %p354 = por %p352, %p353
      %p356 = scmp.ne.s32.totalorder %s339, %s355
      %p357 = scmp.eq.s32.totalorder %s33, 0
      %p358 = por %p356, %p357
      %s359 = ssub.s32 %s27, %s34
      %p360 = scmp.eq.s32.totalorder %s359, 0
      %s362 = sadd.s32 %s361, 1
      %s363 = scalar_select %p360, %s361, %s362
      %p366 = pneg %p360
      %p367 = scmp.eq.s32.totalorder %s27, 1
      %p368 = por %p366, %p367
      %p369 = scmp.ne.s32.totalorder %s361, %s364
      %p370 = scmp.eq.s32.totalorder %s27, 0
      %p371 = por %p369, %p370
      %p372 = scmp.ne.s32.totalorder %s361, %s364
      %p373 = scmp.eq.s32.totalorder %s32, 1
      %p374 = por %p372, %p373
      %p375 = scmp.ne.s32.totalorder %s364, %s365
      %p376 = scmp.eq.s32.totalorder %s32, 0
      %p377 = por %p375, %p376
      %p378 = scmp.ne.s32.totalorder %s364, %s365
      %p379 = scmp.eq.s32.totalorder %s33, 1
      %p380 = por %p378, %p379
      %p382 = scmp.ne.s32.totalorder %s365, %s381
      %p383 = scmp.eq.s32.totalorder %s33, 0
      %p384 = por %p382, %p383
      %p385 = scmp.le.s32.totalorder 1, %s27
      %p386 = scmp.lt.s32.totalorder %s27, 3
      %p387 = pnand %p385, %p386
      %p388 = pneg %p387
      // Predicated region
      $region9: #{tpu_custom_call.1} parent=5 // pred_check
        _
      $region10: #{tpu_custom_call.1} parent=5 // pred_check_branch
        %390 = sbr.rel (%p387) target = $region12
      $region11: #{tpu_custom_call.1} parent=5 // pred_region
        %s391 = ssub.s32 %s27, 1
        // Predicated region
        $region13: #{tpu_custom_call.1} parent=11 // pred_check
          %p392 = pneg %p100
        $region14: #{tpu_custom_call.1} parent=11 // pred_check_branch
          %394 = sbr.rel (%p392) target = $region16
        $region15: #{tpu_custom_call.1} parent=11 // pred_region
          _
        $region16: #{tpu_custom_call.1} parent=11 // pred_fallthru
          _
        // Predicated region
        $region17: #{tpu_custom_call.1} parent=11 // pred_check
          %p395 = pneg %p121
        $region18: #{tpu_custom_call.1} parent=11 // pred_check_branch
          %397 = sbr.rel (%p395) target = $region20
        $region19: #{tpu_custom_call.1} parent=11 // pred_region
          _
        $region20: #{tpu_custom_call.1} parent=11 // pred_fallthru
          _
        // Predicated region
        $region21: #{tpu_custom_call.1} parent=11 // pred_check
          %p398 = pneg %p142
        $region22: #{tpu_custom_call.1} parent=11 // pred_check_branch
          %400 = sbr.rel (%p398) target = $region24
        $region23: #{tpu_custom_call.1} parent=11 // pred_region
          _
        $region24: #{tpu_custom_call.1} parent=11 // pred_fallthru
          _
        // Predicated region
        $region25: #{tpu_custom_call.1} parent=11 // pred_check
          %p401 = pneg %p163
        $region26: #{tpu_custom_call.1} parent=11 // pred_check_branch
          %403 = sbr.rel (%p401) target = $region28
        $region27: #{tpu_custom_call.1} parent=11 // pred_region
          _
        $region28: #{tpu_custom_call.1} parent=11 // pred_fallthru
          _
        // Predicated region
        $region29: #{tpu_custom_call.1} parent=11 // pred_check
          %p404 = pneg %p184
        $region30: #{tpu_custom_call.1} parent=11 // pred_check_branch
          %406 = sbr.rel (%p404) target = $region32
        $region31: #{tpu_custom_call.1} parent=11 // pred_region
          _
        $region32: #{tpu_custom_call.1} parent=11 // pred_fallthru
          _
        // Predicated region
        $region33: #{tpu_custom_call.1} parent=11 // pred_check
          %p407 = pneg %p205
        $region34: #{tpu_custom_call.1} parent=11 // pred_check_branch
          %409 = sbr.rel (%p407) target = $region36
        $region35: #{tpu_custom_call.1} parent=11 // pred_region
          _
        $region36: #{tpu_custom_call.1} parent=11 // pred_fallthru
          _
        // Predicated region
        $region37: #{tpu_custom_call.1} parent=11 // pred_check
          %p410 = pneg %p226
        $region38: #{tpu_custom_call.1} parent=11 // pred_check_branch
          %412 = sbr.rel (%p410) target = $region40
        $region39: #{tpu_custom_call.1} parent=11 // pred_region
          _
        $region40: #{tpu_custom_call.1} parent=11 // pred_fallthru
          _
        // Predicated region
        $region41: #{tpu_custom_call.1} parent=11 // pred_check
          %p413 = pneg %p247
        $region42: #{tpu_custom_call.1} parent=11 // pred_check_branch
          %415 = sbr.rel (%p413) target = $region44
        $region43: #{tpu_custom_call.1} parent=11 // pred_region
          _
        $region44: #{tpu_custom_call.1} parent=11 // pred_fallthru
          _
      $region12: #{tpu_custom_call.1} parent=5 // pred_fallthru
        _
      %p416 = scmp.lt.s32.totalorder %s27, 2
      // Predicated region
      $region45: #{tpu_custom_call.1} parent=5 // pred_check
        %p417 = pneg %p416
      $region46: #{tpu_custom_call.1} parent=5 // pred_check_branch
        %419 = sbr.rel (%p417) target = $region48
      $region47: #{tpu_custom_call.1} parent=5 // pred_region
        // Predicated region
        $region49: #{tpu_custom_call.1} parent=47 // pred_check
          %p420 = pneg %p47
        $region50: #{tpu_custom_call.1} parent=47 // pred_check_branch
          %422 = sbr.rel (%p420) target = $region52
        $region51: #{tpu_custom_call.1} parent=47 // pred_region
          %p423 = scmp.lt.s32.totalorder %s27, 1
          %s424 = scalar_select %p423, %s27, 1
          %s425 = smul.addr %s424, 2
          %s426 = smul.addr %s425, 8
          %s427 = scalar_lea.vmem %s0, %s426
        $region52: #{tpu_custom_call.1} parent=47 // pred_fallthru
          _
        // Predicated region
        $region53: #{tpu_custom_call.1} parent=47 // pred_check
          %p428 = pneg %p73
        $region54: #{tpu_custom_call.1} parent=47 // pred_check_branch
          %430 = sbr.rel (%p428) target = $region56
        $region55: #{tpu_custom_call.1} parent=47 // pred_region
          %p431 = scmp.lt.s32.totalorder %s27, 1
          %s432 = scalar_select %p431, %s27, 1
          %s433 = smul.addr %s432, 2
          %s434 = smul.addr %s433, 8
          %s435 = scalar_lea.vmem %s1, %s434
        $region56: #{tpu_custom_call.1} parent=47 // pred_fallthru
          _
      $region48: #{tpu_custom_call.1} parent=5 // pred_fallthru
        _
      %p436 = scmp.le.s32.totalorder 1, %s27
      %p437 = scmp.lt.s32.totalorder %s27, 3
      %p438 = pnand %p436, %p437
      %p439 = pneg %p438
      // Predicated region
      $region57: #{tpu_custom_call.1} parent=5 // pred_check
        _
      $region58: #{tpu_custom_call.1} parent=5 // pred_check_branch
        %441 = sbr.rel (%p438) target = $region60
      $region59: #{tpu_custom_call.1} parent=5 // pred_region
        %s442 = ssub.s32 %s27, 1
        %p443 = scmp.lt.s32.totalorder %s32, 1
        %s444 = scalar_select %p443, %s32, 1
        %s445 = smul.addr %s444, 2
        %s446 = smul.addr %s445, 8
        %s447 = scalar_lea.vmem %s0, %s446
        %p448 = pneg %p53
        %p449 = pneg %p50
        %p450 = scmp.lt.s32.totalorder %s32, 1
        %s451 = scalar_select %p450, %s32, 1
        %s452 = smul.addr %s451, 2
        %s453 = smul.addr %s452, 8
        %s454 = scalar_lea.vmem %s1, %s453
        %p455 = pneg %p79
        %p456 = pneg %p76
        %p457 = pneg %p100
        %p458 = pneg %p97
        %p459 = pneg %p121
        %p460 = pneg %p118
        %p461 = pneg %p142
        %p462 = pneg %p139
        %p463 = pneg %p163
        %p464 = pneg %p160
        %p465 = pneg %p184
        %p466 = pneg %p181
        %p467 = pneg %p205
        %p468 = pneg %p202
        %p469 = pneg %p226
        %p470 = pneg %p223
        %p471 = pneg %p247
        %p472 = pneg %p244
        %p473 = pneg %p273
        %p474 = pneg %p270
        %p475 = scmp.lt.s32.totalorder %s32, 1
        %s476 = scalar_select %p475, %s32, 1
        %s477 = smul.addr %s476, 2
        %s478 = smul.addr %s477, 8
        %s479 = scalar_lea.vmem %s10, %s478
        %p480 = pneg %p299
        %p481 = pneg %p296
        %p482 = scmp.lt.s32.totalorder %s32, 1
        %s483 = scalar_select %p482, %s32, 1
        %s484 = smul.addr %s483, 2
        %s485 = smul.addr %s484, 8
        %s486 = scalar_lea.vmem %s11, %s485
        %p487 = pneg %p325
        %p488 = pneg %p322
        %p489 = scmp.lt.s32.totalorder %s32, 1
        %s490 = scalar_select %p489, %s32, 1
        %s491 = smul.addr %s490, 2
        %s492 = smul.addr %s491, 8
        %s493 = scalar_lea.vmem %s12, %s492
        %p494 = pneg %p351
        %p495 = pneg %p348
        %s496 = sand.u32 %s338, 1
        %s497 = scalar_lea.sflag [#allocation3], %s496
        %s498 = sand.u32 %s338, 1
        %s499 = smul.addr %s498, 16
        %s500 = scalar_lea.vmem [#allocation2], %s499
        %p501 = pneg %p377
        %p502 = pneg %p374
        %s503 = sand.u32 %s364, 1
        %s504 = scalar_lea.sflag [#allocation5], %s503
        %s505 = sand.u32 %s364, 1
        %s506 = smul.addr %s505, 4
        %s507 = scalar_lea.vmem [#allocation4], %s506
        %p508 = scmp.lt.s32.totalorder %s32, 1
        %s509 = scalar_select %p508, %s32, 1
        %s510 = smul.addr %s509, 2
        %s511 = smul.addr %s510, 8
        %s512 = scalar_lea.vmem %s0, %s511
        %p513 = scmp.lt.s32.totalorder %s32, 1
        %s514 = scalar_select %p513, %s32, 1
        %s515 = smul.addr %s514, 2
        %s516 = smul.addr %s515, 8
        %s517 = scalar_lea.vmem %s1, %s516
        %p518 = scmp.lt.s32.totalorder %s32, 1
        %s519 = scalar_select %p518, %s32, 1
        %s520 = smul.addr %s519, 2
        %s521 = smul.addr %s520, 8
        %s522 = scalar_lea.vmem %s10, %s521
        %p523 = scmp.lt.s32.totalorder %s32, 1
        %s524 = scalar_select %p523, %s32, 1
        %s525 = smul.addr %s524, 2
        %s526 = smul.addr %s525, 8
        %s527 = scalar_lea.vmem %s11, %s526
        %p528 = scmp.lt.s32.totalorder %s32, 1
        %s529 = scalar_select %p528, %s32, 1
        %s530 = smul.addr %s529, 2
        %s531 = smul.addr %s530, 8
        %s532 = scalar_lea.vmem %s12, %s531
        %v534 = vld [vmem:[%s512] sm:$0xff]
        %v535 = vld [vmem:[%s512 + $0x8] sm:$0xff]
        %v536 = vpack.c.bf16 %v535, %v534
        %v537 = vld [vmem:[%s2] sm:$0xf]
        %v538 = vld [vmem:[%s2 + $0x4] sm:$0xf]
        %v539 = vld [vmem:[%s2 + $0x8] sm:$0xf]
        %v540 = vld [vmem:[%s2 + $0xc] sm:$0xf]
        %v541 = vld [vmem:[%s3] sm:$0x1]
        %v543 = vlaneseq
        %v544 = vshrl.u32 %v543, 7
        %v545 = vsub.s32 0, %v544
        %v546 = vrot.slane %v541, %v545
        %v552 = vunpack.c.l.b16 %v537
        %v553 = vunpack.c.l.b16 %v538
        %v554 = vunpack.c.l.b16 %v539
        %v555 = vunpack.c.l.b16 %v540
        %v556 = vpack.c.b16 %v553, %v552
        %v557 = vpack.c.b16 %v555, %v554
        %vm560 = vcmask 261120
        %v562 = vsel %vm560, %v536, 0
        %564 = vmatprep.subr.bf16.mxu0 0
        %565 = vmatpush1.bf16.msra.mxu0 %v556
        %566 = vmatprep.subr.bf16.mxu0 0
        %567 = vmatpush1.bf16.msra.mxu0 %v557
        %568 = vmatprep.subr.bf16.mxu0 0
        %569 = vmatpush1.bf16.msra.mxu0 0
        %570 = vmatprep.subr.bf16.mxu0 0
        %571 = vmatpush1.bf16.msra.mxu0 0
        %572 = vmatprep.subr.bf16.mxu0 0
        %573 = vmatpush1.bf16.msra.mxu0 0
        %574 = vmatprep.subr.bf16.mxu0 0
        %575 = vmatpush1.bf16.msra.mxu0 0
        %576 = vmatprep.subr.bf16.mxu0 0
        %577 = vmatpush1.bf16.msra.mxu0 0
        %578 = vmatprep.subr.bf16.mxu0 0
        %579 = vmatpush1.bf16.msra.mxu0 0
        %580 = vmatprep.subr.bf16.mxu0 0
        %581 = vmatpush1.bf16.msra.mxu0 0
        %582 = vmatprep.subr.bf16.mxu0 0
        %583 = vmatpush1.bf16.msra.mxu0 0
        %584 = vmatprep.subr.bf16.mxu0 0
        %585 = vmatpush1.bf16.msra.mxu0 0
        %586 = vmatprep.subr.bf16.mxu0 0
        %587 = vmatpush1.bf16.msra.mxu0 0
        %588 = vmatprep.subr.bf16.mxu0 0
        %589 = vmatpush1.bf16.msra.mxu0 0
        %590 = vmatprep.subr.bf16.mxu0 0
        %591 = vmatpush1.bf16.msra.mxu0 0
        %592 = vmatprep.subr.bf16.mxu0 0
        %593 = vmatpush1.bf16.msra.mxu0 0
        %594 = vmatprep.subr.bf16.mxu0 0
        %595 = vmatpush1.bf16.msra.mxu0 0
        %596 = vmatprep.mubr.bf16.mxu0 0
        %597 = vmatmul.mubr.bf16.gmra.mrb[0].mxu0 %v562
        %v598 = vpop.f32.mrb[0].mxu0
        %v599 = vadd.f32 %v546, %v598
        %v600 = vpop.f32.mrb[0].mxu0
        %v601 = vpop.f32.mrb[0].mxu0
        %v602 = vadd.f32 %v546, %v601
        %v603 = vpop.f32.mrb[0].mxu0
        %604 = vdwg.mxu0
        %v605 = vmax.f32 %v599, 0.0
        %v606 = vmax.f32 %v602, 0.0
        %vm607 = vcmp.ne.f32.partialorder %v599, %v599
        %vm608 = vcmp.ne.f32.partialorder %v602, %v602
        %v609 = vadd.f32 %v599, 0.0
        %v610 = vadd.f32 %v602, 0.0
        %v611 = vand.u32 2147483647, %v599
        %v612 = vand.u32 2147483647, %v602
        %v613 = vsub.f32 0.0, %v611
        %v614 = vsub.f32 0.0, %v612
        %v615 = vmul.f32 %v613, 1.442695
        %v616 = vpow.pop %v615
        %v617 = vmul.f32 %v614, 1.442695
        %v618 = vpow.pop %v617
        %v619 = vadd.f32 %v616, 1.0
        %v620 = vlog2.pop %v619
        %v621 = vmul.f32 %v620, 0.6931472
        %v622 = vmul.f32 -0.5, %v616
        %v623 = vadd.f32 %v622, 1.0
        %v624 = vmul.f32 %v623, %v616
        %v625 = vand.u32 2147483647, %v616
        %vm626 = vcmp.lt.f32.partialorder %v625, 0.0004427343
        %v627 = vsel %vm626, %v624, %v621
        %v628 = vadd.f32 %v618, 1.0
        %v629 = vlog2.pop %v628
        %v630 = vmul.f32 %v629, 0.6931472
        %v631 = vmul.f32 -0.5, %v618
        %v632 = vadd.f32 %v631, 1.0
        %v633 = vmul.f32 %v632, %v618
        %v634 = vand.u32 2147483647, %v618
        %vm635 = vcmp.lt.f32.partialorder %v634, 0.0004427343
        %v636 = vsel %vm635, %v633, %v630
        %v637 = vadd.f32 %v605, %v627
        %v638 = vadd.f32 %v606, %v636
        %v639 = vsel %vm607, %v609, %v637
        %v640 = vsel %vm608, %v610, %v638
        %v641 = vld [vmem:[%s517] sm:$0xff]
        %v642 = vld [vmem:[%s517 + $0x8] sm:$0xff]
        %645 = vrot.lane.b32.xlu0 %v641, 8
        %v646 = vpop.permute.xlu0 %645
        %647 = vrot.lane.b32.xlu0 %v642, 8
        %v648 = vpop.permute.xlu0 %647
        %v651 = vmul.f32 %v639, %v646
        %v652 = vmul.f32 %v640, %v648
        %655 = vrot.lane.b32.xlu0 %v651, 120
        %v656 = vpop.permute.xlu0 %655
        %657 = vrot.lane.b32.xlu0 %v652, 120
        %v658 = vpop.permute.xlu0 %657
        %v661 = vadd.f32 %v599, %v656
        %v662 = vadd.f32 %v602, %v658
        %vm663 = vcmask 64512
        %664 = vst.msk [vmem:[%s527] sm:$0xff] %vm663, %v599
        %665 = vst.msk [vmem:[%s527 + $0x8] sm:$0xff] %vm663, %v602
        %668 = vrot.lane.b32.xlu0 %v639, 120
        %v669 = vpop.permute.xlu0 %668
        %670 = vrot.lane.b32.xlu0 %v640, 120
        %v671 = vpop.permute.xlu0 %670
        %674 = vst.msk [vmem:[%s532] sm:$0xff] %vm663, %v669
        %675 = vst.msk [vmem:[%s532 + $0x8] sm:$0xff] %vm663, %v671
        %676 = vst.msk [vmem:[%s522] sm:$0xff] %vm663, %v661
        %677 = vst.msk [vmem:[%s522 + $0x8] sm:$0xff] %vm663, %v662
        %v678 = vpack.c.bf16 %v662, %v661
        %v679 = vld [vmem:[%s4] sm:$0xf]
        %v680 = vld [vmem:[%s5] sm:$0x1]
        %v682 = vlaneseq
        %v683 = vshrl.u32 %v682, 7
        %v684 = vsub.s32 0, %v683
        %v685 = vrot.slane %v680, %v684
        %v688 = vsel %vm663, %v678, 0
        %vm690 = vcmask 1043456
        %v692 = vsel %vm690, %v679, 0
        %694 = vmatprep.subr.bf16.mxu0 0
        %695 = vmatpush1.bf16.msra.mxu0 %v692
        %696 = vmatprep.subr.bf16.mxu0 0
        %697 = vmatpush1.bf16.msra.mxu0 0
        %698 = vmatprep.subr.bf16.mxu0 0
        %699 = vmatpush1.bf16.msra.mxu0 0
        %700 = vmatprep.subr.bf16.mxu0 0
        %701 = vmatpush1.bf16.msra.mxu0 0
        %702 = vmatprep.subr.bf16.mxu0 0
        %703 = vmatpush1.bf16.msra.mxu0 0
        %704 = vmatprep.subr.bf16.mxu0 0
        %705 = vmatpush1.bf16.msra.mxu0 0
        %706 = vmatprep.subr.bf16.mxu0 0
        %707 = vmatpush1.bf16.msra.mxu0 0
        %708 = vmatprep.subr.bf16.mxu0 0
        %709 = vmatpush1.bf16.msra.mxu0 0
        %710 = vmatprep.subr.bf16.mxu0 0
        %711 = vmatpush1.bf16.msra.mxu0 0
        %712 = vmatprep.subr.bf16.mxu0 0
        %713 = vmatpush1.bf16.msra.mxu0 0
        %714 = vmatprep.subr.bf16.mxu0 0
        %715 = vmatpush1.bf16.msra.mxu0 0
        %716 = vmatprep.subr.bf16.mxu0 0
        %717 = vmatpush1.bf16.msra.mxu0 0
        %718 = vmatprep.subr.bf16.mxu0 0
        %719 = vmatpush1.bf16.msra.mxu0 0
        %720 = vmatprep.subr.bf16.mxu0 0
        %721 = vmatpush1.bf16.msra.mxu0 0
        %722 = vmatprep.subr.bf16.mxu0 0
        %723 = vmatpush1.bf16.msra.mxu0 0
        %724 = vmatprep.subr.bf16.mxu0 0
        %725 = vmatpush1.bf16.msra.mxu0 0
        %726 = vmatprep.mubr.bf16.mxu0 0
        %727 = vmatmul.mubr.bf16.gmra.mrb[0].mxu0 %v688
        %v728 = vpop.f32.mrb[0].mxu0
        %v729 = vadd.f32 %v685, %v728
        %v730 = vpop.f32.mrb[0].mxu0
        %v731 = vpop.f32.mrb[0].mxu0
        %v732 = vadd.f32 %v685, %v731
        %v733 = vpop.f32.mrb[0].mxu0
        %734 = vdwg.mxu0
        %735 = vst.msk [vmem:[%s500] sm:$0xff] %vm560, %v729
        %736 = vst.msk [vmem:[%s500 + $0x8] sm:$0xff] %vm560, %v732
        %v737 = vpack.c.bf16 %v602, %v599
        %v738 = vld [vmem:[%s6] sm:$0xf]
        %v739 = vld [vmem:[%s6 + $0x4] sm:$0xf]
        %v740 = vld [vmem:[%s7] sm:$0x1]
        %v742 = vlaneseq
        %v743 = vshrl.u32 %v742, 7
        %v744 = vsub.s32 0, %v743
        %v745 = vrot.slane %v740, %v744
        %747 = vxpose.xlu0.c.b16.start [1/8] %v737, 128
        %748 = vxpose.xlu0.c.b16.cont [2/8] 0, 128
        %749 = vxpose.xlu0.c.b16.cont [3/8] 0, 128
        %750 = vxpose.xlu0.c.b16.cont [4/8] 0, 128
        %751 = vxpose.xlu0.c.b16.cont [5/8] 0, 128
        %752 = vxpose.xlu0.c.b16.cont [6/8] 0, 128
        %753 = vxpose.xlu0.c.b16.cont [7/8] 0, 128
        %754 = vxpose.xlu0.c.b16.end [8/8] 0, 128
        %v755 = vpop.trf.xlu0
        %v756 = vpop.trf.xlu0
        %v757 = vpop.trf.xlu0
        %v758 = vpop.trf.xlu0
        %v759 = vpop.trf.xlu0
        %v760 = vpop.trf.xlu0
        %v761 = vpop.trf.xlu0
        %v762 = vpop.trf.xlu0
        %v765 = vunpack.c.l.b16 %v738
        %v766 = vunpack.c.l.b16 %v739
        %v767 = vpack.c.b16 %v766, %v765
        %vm769 = vcmask 130048
        %v771 = vsel %vm769, %v755, 0
        %773 = vmatprep.subr.bf16.mxu0 0
        %774 = vmatpush1.bf16.msra.mxu0 %v767
        %775 = vmatprep.subr.bf16.mxu0 0
        %776 = vmatpush1.bf16.msra.mxu0 0
        %777 = vmatprep.subr.bf16.mxu0 0
        %778 = vmatpush1.bf16.msra.mxu0 0
        %779 = vmatprep.subr.bf16.mxu0 0
        %780 = vmatpush1.bf16.msra.mxu0 0
        %781 = vmatprep.subr.bf16.mxu0 0
        %782 = vmatpush1.bf16.msra.mxu0 0
        %783 = vmatprep.subr.bf16.mxu0 0
        %784 = vmatpush1.bf16.msra.mxu0 0
        %785 = vmatprep.subr.bf16.mxu0 0
        %786 = vmatpush1.bf16.msra.mxu0 0
        %787 = vmatprep.subr.bf16.mxu0 0
        %788 = vmatpush1.bf16.msra.mxu0 0
        %789 = vmatprep.subr.bf16.mxu0 0
        %790 = vmatpush1.bf16.msra.mxu0 0
        %791 = vmatprep.subr.bf16.mxu0 0
        %792 = vmatpush1.bf16.msra.mxu0 0
        %793 = vmatprep.subr.bf16.mxu0 0
        %794 = vmatpush1.bf16.msra.mxu0 0
        %795 = vmatprep.subr.bf16.mxu0 0
        %796 = vmatpush1.bf16.msra.mxu0 0
        %797 = vmatprep.subr.bf16.mxu0 0
        %798 = vmatpush1.bf16.msra.mxu0 0
        %799 = vmatprep.subr.bf16.mxu0 0
        %800 = vmatpush1.bf16.msra.mxu0 0
        %801 = vmatprep.subr.bf16.mxu0 0
        %802 = vmatpush1.bf16.msra.mxu0 0
        %803 = vmatprep.subr.bf16.mxu0 0
        %804 = vmatpush1.bf16.msra.mxu0 0
        %805 = vmatprep.mubr.bf16.mxu0 0
        %806 = vmatmul.mubr.bf16.gmra.mrb[0].mxu0 %v771
        %v807 = vpop.f32.mrb[0].mxu0
        %v808 = vadd.f32 %v745, %v807
        %v809 = vpop.f32.mrb[0].mxu0
        %v810 = vpop.f32.mrb[0].mxu0
        %v811 = vpop.f32.mrb[0].mxu0
        %812 = vdwg.mxu0
        %v813 = vpack.c.bf16 %v808, %v808
        %v814 = vld [vmem:[%s8] sm:$0xf]
        %v815 = vld [vmem:[%s9] sm:$0x1]
        %v817 = vlaneseq
        %v818 = vshrl.u32 %v817, 7
        %v819 = vsub.s32 0, %v818
        %v820 = vrot.slane %v815, %v819
        %822 = vxpose.xlu0.c.b16.start [1/8] %v813, 128
        %823 = vxpose.xlu0.c.b16.cont [2/8] 0, 128
        %824 = vxpose.xlu0.c.b16.cont [3/8] 0, 128
        %825 = vxpose.xlu0.c.b16.cont [4/8] 0, 128
        %826 = vxpose.xlu0.c.b16.cont [5/8] 0, 128
        %827 = vxpose.xlu0.c.b16.cont [6/8] 0, 128
        %828 = vxpose.xlu0.c.b16.cont [7/8] 0, 128
        %829 = vxpose.xlu0.c.b16.end [8/8] 0, 128
        %v830 = vpop.trf.xlu0
        %v831 = vpop.trf.xlu0
        %v832 = vpop.trf.xlu0
        %v833 = vpop.trf.xlu0
        %v834 = vpop.trf.xlu0
        %v835 = vpop.trf.xlu0
        %v836 = vpop.trf.xlu0
        %v837 = vpop.trf.xlu0
        %v839 = vsel %vm663, %v830, 0
        %v842 = vsel %vm690, %v814, 0
        %844 = vmatprep.subr.bf16.mxu0 0
        %845 = vmatpush1.bf16.msra.mxu0 %v842
        %846 = vmatprep.subr.bf16.mxu0 0
        %847 = vmatpush1.bf16.msra.mxu0 0
        %848 = vmatprep.subr.bf16.mxu0 0
        %849 = vmatpush1.bf16.msra.mxu0 0
        %850 = vmatprep.subr.bf16.mxu0 0
        %851 = vmatpush1.bf16.msra.mxu0 0
        %852 = vmatprep.subr.bf16.mxu0 0
        %853 = vmatpush1.bf16.msra.mxu0 0
        %854 = vmatprep.subr.bf16.mxu0 0
        %855 = vmatpush1.bf16.msra.mxu0 0
        %856 = vmatprep.subr.bf16.mxu0 0
        %857 = vmatpush1.bf16.msra.mxu0 0
        %858 = vmatprep.subr.bf16.mxu0 0
        %859 = vmatpush1.bf16.msra.mxu0 0
        %860 = vmatprep.subr.bf16.mxu0 0
        %861 = vmatpush1.bf16.msra.mxu0 0
        %862 = vmatprep.subr.bf16.mxu0 0
        %863 = vmatpush1.bf16.msra.mxu0 0
        %864 = vmatprep.subr.bf16.mxu0 0
        %865 = vmatpush1.bf16.msra.mxu0 0
        %866 = vmatprep.subr.bf16.mxu0 0
        %867 = vmatpush1.bf16.msra.mxu0 0
        %868 = vmatprep.subr.bf16.mxu0 0
        %869 = vmatpush1.bf16.msra.mxu0 0
        %870 = vmatprep.subr.bf16.mxu0 0
        %871 = vmatpush1.bf16.msra.mxu0 0
        %872 = vmatprep.subr.bf16.mxu0 0
        %873 = vmatpush1.bf16.msra.mxu0 0
        %874 = vmatprep.subr.bf16.mxu0 0
        %875 = vmatpush1.bf16.msra.mxu0 0
        %876 = vmatprep.mubr.bf16.mxu0 0
        %877 = vmatmul.mubr.bf16.gmra.mrb[0].mxu0 %v839
        %v878 = vpop.f32.mrb[0].mxu0
        %v879 = vadd.f32 %v820, %v878
        %v880 = vpop.f32.mrb[0].mxu0
        %v881 = vpop.f32.mrb[0].mxu0
        %v882 = vpop.f32.mrb[0].mxu0
        %883 = vdwg.mxu0
        %vm884 = vcmask 257024
        %885 = vst.msk [vmem:[%s507] sm:$0xf] %vm884, %v879
        %p886 = scmp.lt.s32.totalorder %s32, 1
        %s887 = scalar_select %p886, %s32, 1
        %s888 = smul.addr %s887, 2
        %s889 = smul.addr %s888, 8
        %s890 = scalar_lea.vmem %s10, %s889
        %p891 = scmp.lt.s32.totalorder %s32, 1
        %s892 = scalar_select %p891, %s32, 1
        %s893 = smul.addr %s892, 2
        %s894 = smul.addr %s893, 8
        %s895 = scalar_lea.vmem %s11, %s894
        %p896 = scmp.lt.s32.totalorder %s32, 1
        %s897 = scalar_select %p896, %s32, 1
        %s898 = smul.addr %s897, 2
        %s899 = smul.addr %s898, 8
        %s900 = scalar_lea.vmem %s12, %s899
        %s901 = sand.u32 %s338, 1
        %s902 = scalar_lea.sflag [#allocation3], %s901
        %s903 = sand.u32 %s338, 1
        %s904 = smul.addr %s903, 16
        %s905 = scalar_lea.vmem [#allocation2], %s904
        %s906 = sand.u32 %s364, 1
        %s907 = scalar_lea.sflag [#allocation5], %s906
        %s908 = sand.u32 %s364, 1
        %s909 = smul.addr %s908, 4
        %s910 = scalar_lea.vmem [#allocation4], %s909
        // Predicated region
        $region61: #{tpu_custom_call.1} parent=59 // pred_check
          %p911 = pneg %p270
        $region62: #{tpu_custom_call.1} parent=59 // pred_check_branch
          %913 = sbr.rel (%p911) target = $region64
        $region63: #{tpu_custom_call.1} parent=59 // pred_region
          _
        $region64: #{tpu_custom_call.1} parent=59 // pred_fallthru
          _
        // Predicated region
        $region65: #{tpu_custom_call.1} parent=59 // pred_check
          %p914 = pneg %p296
        $region66: #{tpu_custom_call.1} parent=59 // pred_check_branch
          %916 = sbr.rel (%p914) target = $region68
        $region67: #{tpu_custom_call.1} parent=59 // pred_region
          _
        $region68: #{tpu_custom_call.1} parent=59 // pred_fallthru
          _
        // Predicated region
        $region69: #{tpu_custom_call.1} parent=59 // pred_check
          %p917 = pneg %p322
        $region70: #{tpu_custom_call.1} parent=59 // pred_check_branch
          %919 = sbr.rel (%p917) target = $region72
        $region71: #{tpu_custom_call.1} parent=59 // pred_region
          _
        $region72: #{tpu_custom_call.1} parent=59 // pred_fallthru
          _
        // Predicated region
        $region73: #{tpu_custom_call.1} parent=59 // pred_check
          %p920 = pneg %p348
        $region74: #{tpu_custom_call.1} parent=59 // pred_check_branch
          %922 = sbr.rel (%p920) target = $region76
        $region75: #{tpu_custom_call.1} parent=59 // pred_region
          %s924 = ssub.s32 256, 256
          %925 = vsyncadd %s902, %s924
          %s926 = smul.addr %s32, 2
          %s927 = smul.addr %s926, 128
          %s928 = scalar_lea.hbm %s13, %s927
          %s929 = sshll.u32 %s905, 4
          %s930 = int_to_ptr.vmem [resolvable:$true] %s929
          %935 = dma.vmem_to_hbm [thread:$0]  %s930, 256, %s928, %s902, 128, 128, 8
        $region76: #{tpu_custom_call.1} parent=59 // pred_fallthru
          _
        // Predicated region
        $region77: #{tpu_custom_call.1} parent=59 // pred_check
          %p936 = pneg %p374
        $region78: #{tpu_custom_call.1} parent=59 // pred_check_branch
          %938 = sbr.rel (%p936) target = $region80
        $region79: #{tpu_custom_call.1} parent=59 // pred_region
          %s940 = ssub.s32 64, 64
          %941 = vsyncadd %s907, %s940
          %s942 = smul.addr %s32, 64
          %s943 = scalar_lea.hbm %s14, %s942
          %s945 = sshll.u32 %s910, 4
          %s946 = int_to_ptr.vmem [resolvable:$true] %s945
          %948 = dma.vmem_to_hbm [thread:$0]  %s946, 64, %s943, %s907
        $region80: #{tpu_custom_call.1} parent=59 // pred_fallthru
          _
      $region60: #{tpu_custom_call.1} parent=5 // pred_fallthru
        _
      %p949 = scmp.le.s32.totalorder 2, %s27
      // Predicated region
      $region81: #{tpu_custom_call.1} parent=5 // pred_check
        %p950 = pneg %p949
      $region82: #{tpu_custom_call.1} parent=5 // pred_check_branch
        %952 = sbr.rel (%p950) target = $region84
      $region83: #{tpu_custom_call.1} parent=5 // pred_region
        %s953 = ssub.s32 %s27, 2
        // Predicated region
        $region85: #{tpu_custom_call.1} parent=83 // pred_check
          %p954 = pneg %p276
        $region86: #{tpu_custom_call.1} parent=83 // pred_check_branch
          %956 = sbr.rel (%p954) target = $region88
        $region87: #{tpu_custom_call.1} parent=83 // pred_region
          %p957 = scmp.lt.s32.totalorder %s33, 1
          %s958 = scalar_select %p957, %s33, 1
          %s959 = smul.addr %s958, 2
          %s960 = smul.addr %s959, 8
          %s961 = scalar_lea.vmem %s10, %s960
        $region88: #{tpu_custom_call.1} parent=83 // pred_fallthru
          _
        // Predicated region
        $region89: #{tpu_custom_call.1} parent=83 // pred_check
          %p962 = pneg %p302
        $region90: #{tpu_custom_call.1} parent=83 // pred_check_branch
          %964 = sbr.rel (%p962) target = $region92
        $region91: #{tpu_custom_call.1} parent=83 // pred_region
          %p965 = scmp.lt.s32.totalorder %s33, 1
          %s966 = scalar_select %p965, %s33, 1
          %s967 = smul.addr %s966, 2
          %s968 = smul.addr %s967, 8
          %s969 = scalar_lea.vmem %s11, %s968
        $region92: #{tpu_custom_call.1} parent=83 // pred_fallthru
          _
        // Predicated region
        $region93: #{tpu_custom_call.1} parent=83 // pred_check
          %p970 = pneg %p328
        $region94: #{tpu_custom_call.1} parent=83 // pred_check_branch
          %972 = sbr.rel (%p970) target = $region96
        $region95: #{tpu_custom_call.1} parent=83 // pred_region
          %p973 = scmp.lt.s32.totalorder %s33, 1
          %s974 = scalar_select %p973, %s33, 1
          %s975 = smul.addr %s974, 2
          %s976 = smul.addr %s975, 8
          %s977 = scalar_lea.vmem %s12, %s976
        $region96: #{tpu_custom_call.1} parent=83 // pred_fallthru
          _
        // Predicated region
        $region97: #{tpu_custom_call.1} parent=83 // pred_check
          %p978 = pneg %p354
        $region98: #{tpu_custom_call.1} parent=83 // pred_check_branch
          %980 = sbr.rel (%p978) target = $region100
        $region99: #{tpu_custom_call.1} parent=83 // pred_region
          %s981 = sand.u32 %s339, 1
          %s982 = scalar_lea.sflag [#allocation3], %s981
          %s983 = sand.u32 %s339, 1
          %s984 = smul.addr %s983, 16
          %s985 = scalar_lea.vmem [#allocation2], %s984
          %986 = dma.done %s982, 256
        $region100: #{tpu_custom_call.1} parent=83 // pred_fallthru
          _
        // Predicated region
        $region101: #{tpu_custom_call.1} parent=83 // pred_check
          %p987 = pneg %p380
        $region102: #{tpu_custom_call.1} parent=83 // pred_check_branch
          %989 = sbr.rel (%p987) target = $region104
        $region103: #{tpu_custom_call.1} parent=83 // pred_region
          %s990 = sand.u32 %s365, 1
          %s991 = scalar_lea.sflag [#allocation5], %s990
          %s992 = sand.u32 %s365, 1
          %s993 = smul.addr %s992, 4
          %s994 = scalar_lea.vmem [#allocation4], %s993
          %995 = dma.done %s991, 64
        $region104: #{tpu_custom_call.1} parent=83 // pred_fallthru
          _
      $region84: #{tpu_custom_call.1} parent=5 // pred_fallthru
        _
    $region6: #{tpu_custom_call.1} parent=1 // loop_footer
      %s31 = sadd.s32 1, %s27
    $region7: #{tpu_custom_call.1} parent=1 // loop_footer_branch
      %26 = sbr.rel target = $region3
    $region8: #{tpu_custom_call.1} parent=1 // loop_exit
      _
    %996 = vsyncpa [#allocation3], 1
    %s997 = scalar_lea.sflag [#allocation3], 1
    %998 = vsyncpa %s997, 1
    %999 = vsyncpa [#allocation5], 1
    %s1000 = scalar_lea.sflag [#allocation5], 1
    %1001 = vsyncpa %s1000, 1

</llo_original>
